<compile_context>
chip_gen: v6e
topology: v6e:2x2x1
jax: 0.10.0
libtpu: 0.0.40
codegen_flags: <defaults>
</compile_context>

<pallas_src>
import jax
import jax.numpy as jnp
from jax.experimental import pallas as pl
from jax.experimental.pallas import tpu as pltpu

IN_FEATURES = 768  # fixed by nn.Linear(768, dimension)


def _round_up(x, m):
    return (x + m - 1) // m * m


# ----------------------------- kernel bodies -----------------------------

def _ip_kernel(x2_ref, v_ref, c_ref, out_ref):
    # out[0, n] = v . x2[n] + c    (lane-dense (1, TILE_N) row, f32 accumulate)
    s = jax.lax.dot_general(
        v_ref[...], x2_ref[...],
        dimension_numbers=(((1,), (1,)), ((), ())),     # v @ x2^T on the MXU
        preferred_element_type=jnp.float32)
    out_ref[...] = s + c_ref[0, 0]                      # scalar offset from SMEM


def _l2_kernel(x2_ref, w2_ref, d0_ref, out_ref):
    # y2' = x2 @ W2  (bias folded into d0 = y1 - b2 + eps, computed once)
    y2 = jnp.dot(x2_ref[...], w2_ref[...], preferred_element_type=jnp.float32)
    diff = d0_ref[...] - y2                             # (TILE_N, dim_pad), f32
    sq = diff * diff
    ones = jnp.ones((1, sq.shape[1]), jnp.float32)
    ssum = jax.lax.dot_general(                         # MXU reduce -> (1, TILE_N)
        ones, sq,
        dimension_numbers=(((1,), (1,)), ((), ())),
        preferred_element_type=jnp.float32)
    out_ref[...] = -jnp.sqrt(ssum)


# ------------------------------- wrapper ---------------------------------

def contrastive_forward(x1, x2, params, similarity="ip", *,
                        tile_n=2048, compute_dtype=None):
    """ContrastiveLearningModel.forward (model=1).

    x1: (1, 768) query, x2: (N, 768) docs (f32 or bf16 - streamed as stored).
    params: w1 (768, dim), b1 (1, dim), w2 (768, dim), b2 (1, dim).
    Returns (N,) similarity vector (f32).
    """
    w1 = jnp.asarray(params["w1"], jnp.float32)
    b1 = jnp.asarray(params["b1"], jnp.float32)
    w2f = jnp.asarray(params["w2"], jnp.float32)
    b2 = jnp.asarray(params["b2"], jnp.float32)
    x1 = jnp.asarray(x1, jnp.float32)

    n, k = x2.shape
    assert k == IN_FEATURES, f"expected {IN_FEATURES} input features, got {k}"
    dim = w1.shape[1]

    # Stream x2 in the dtype it already lives in (no extra HBM re-cast sweep).
    # Only cast when the caller explicitly forces a different compute dtype.
    stream_dtype = jnp.dtype(compute_dtype) if compute_dtype is not None else x2.dtype
    if x2.dtype != stream_dtype:
        x2 = x2.astype(stream_dtype)    # costs one extra HBM sweep; store docs in stream_dtype upstream instead

    # Query-side precompute: tiny (1,768) matmuls at full f32 precision
    # (matches the f32 PyTorch reference), hoisted out of the streaming kernel.
    hp = jax.lax.Precision.HIGHEST
    y1 = jnp.dot(x1, w1, precision=hp) + b1             # (1, dim), f32

    # ---- doc-axis tiling: NO padding of x2; ragged last tile is masked ----
    if n <= 128:
        tile = max(8, _round_up(n, 8))                  # single small tile
    else:
        tile = max(128, min(_round_up(int(tile_n), 128), 128 * pl.cdiv(n, 128)))
        if pl.cdiv(n, tile) < 2:
            # guarantee >=2 tiles: keeps both v7x TensorCores busy and gives
            # the DMA pipeline something to overlap.
            tile = 128 * ((pl.cdiv(n, 128) + 1) // 2)
    grid = (pl.cdiv(n, tile),)
    n_out = grid[0] * tile                              # tiny lane-dense output row

    dim_pad = _round_up(dim, 128)
    elem = jnp.dtype(stream_dtype).itemsize
    # VMEM budget: double-buffered x2 tile + resident weights + l2 temps + margin.
    vmem_need = (2 * tile * IN_FEATURES * elem
                 + 2 * IN_FEATURES * dim_pad * elem
                 + 4 * tile * dim_pad * 4
                 + (4 << 20))
    vmem_limit = int(min(max(32 << 20, vmem_need), 100 << 20))

    cparams = pltpu.CompilerParams(
        dimension_semantics=("parallel",),              # shard doc tiles across TCs (v7x)
        vmem_limit_bytes=vmem_limit)

    x2_spec = pl.BlockSpec((tile, IN_FEATURES), lambda i: (i, 0))
    out_spec = pl.BlockSpec((1, tile), lambda i: (0, i))
    out_shape = jax.ShapeDtypeStruct((1, n_out), jnp.float32)

    if similarity == "ip":
        # out[n] = (x2[n]@W2 + b2) . y1 = x2[n] . (W2 @ y1^T) + (b2 . y1)
        v = jnp.dot(y1, w2f.T, precision=hp).astype(stream_dtype)     # (1, 768)
        c = jnp.sum(b2 * y1).reshape(1, 1).astype(jnp.float32)        # scalar offset
        out = pl.pallas_call(
            _ip_kernel,
            grid=grid,
            in_specs=[x2_spec,
                      pl.BlockSpec((1, IN_FEATURES), lambda i: (0, 0)),
                      pl.BlockSpec(memory_space=pltpu.MemorySpace.SMEM)],
            out_specs=out_spec,
            out_shape=out_shape,
            compiler_params=cparams,
        )(x2, v, c)
    elif similarity == "l2":
        d0 = y1 - b2 + 1e-6                             # (1, dim), f32
        if dim_pad != dim:
            # tiny (768 x dim) pads; zero columns contribute exactly 0 to the
            # squared distance (w2 column 0 -> y2 col 0, d0 col 0 -> diff 0).
            w2p = jnp.pad(w2f, ((0, 0), (0, dim_pad - dim)))
            d0 = jnp.pad(d0, ((0, 0), (0, dim_pad - dim)))
        else:
            w2p = w2f
        out = pl.pallas_call(
            _l2_kernel,
            grid=grid,
            in_specs=[x2_spec,
                      pl.BlockSpec((IN_FEATURES, dim_pad), lambda i: (0, 0)),
                      pl.BlockSpec((1, dim_pad), lambda i: (0, 0))],
            out_specs=out_spec,
            out_shape=out_shape,
            compiler_params=cparams,
        )(x2, w2p.astype(stream_dtype), d0)
    else:
        raise ValueError("Unknown similarity model")

    return out[0, :n]


def init_params(key, dimension, merge=False):
    """Deterministic init mirroring nn.Linear(768, dimension) shapes."""
    k1, k2, k3, k4 = jax.random.split(key, 4)
    bound = 1.0 / jnp.sqrt(IN_FEATURES)
    w1 = jax.random.uniform(k1, (IN_FEATURES, dimension), jnp.float32, -bound, bound)
    b1 = jax.random.uniform(k2, (1, dimension), jnp.float32, -bound, bound)
    if merge:
        w2, b2 = w1, b1
    else:
        w2 = jax.random.uniform(k3, (IN_FEATURES, dimension), jnp.float32, -bound, bound)
        b2 = jax.random.uniform(k4, (1, dimension), jnp.float32, -bound, bound)
    return {"w1": w1, "b1": b1, "w2": w2, "b2": b2}


# TODO(synk): model=2 (MLP projection 768->1024->768->dim with Tanh) and the
# training loop / optimizer are not kernelized; only model=1 forward is.

if __name__ == "__main__":
    key = jax.random.PRNGKey(0)
    kp, kx1, kx2 = jax.random.split(key, 3)

    dimension = 64   # reduced embedding dimension (padded to 128 inside the l2 path)
    n_docs = 64      # matches the 64 random negatives in the data generator

    params = init_params(kp, dimension, merge=False)
    x1 = jax.random.normal(kx1, (1, IN_FEATURES), jnp.float32)
    x2 = jax.random.normal(kx2, (n_docs, IN_FEATURES), jnp.float32)

    def reference(x1_, x2_, p, sim):
        hp = jax.lax.Precision.HIGHEST
        y1 = jnp.dot(x1_, p["w1"], precision=hp) + p["b1"]
        y2 = jnp.dot(x2_.astype(jnp.float32), p["w2"], precision=hp) + p["b2"]
        if sim == "ip":
            return jnp.sum(y1 * y2, axis=1)
        return -jnp.sqrt(jnp.sum((y1 - y2 + 1e-6) ** 2, axis=1))

    # single small tile (N=64 -> one 64-row tile, no doc-matrix padding)
    for sim in ("ip", "l2"):
        out = jax.block_until_ready(contrastive_forward(x1, x2, params, similarity=sim))
        ref = reference(x1, x2, params, sim)
        assert out.shape == (n_docs,)
        assert jnp.allclose(out, ref, atol=1e-3, rtol=1e-3), (
            sim, float(jnp.max(jnp.abs(out - ref))))

    # multi-tile case with ragged last tile (300 docs -> 2 tiles of 256, no pad of x2)
    n_big = 300
    x2_big = jax.random.normal(jax.random.PRNGKey(1), (n_big, IN_FEATURES), jnp.float32)
    for sim in ("ip", "l2"):
        out = jax.block_until_ready(
            contrastive_forward(x1, x2_big, params, similarity=sim))
        ref = reference(x1, x2_big, params, sim)
        assert out.shape == (n_big,)
        assert jnp.allclose(out, ref, atol=1e-3, rtol=1e-3), (
            sim, float(jnp.max(jnp.abs(out - ref))))

    # forced small tile (grid=3) to exercise multi-step pipelining explicitly
    for sim in ("ip", "l2"):
        out = jax.block_until_ready(
            contrastive_forward(x1, x2_big, params, similarity=sim, tile_n=128))
        ref = reference(x1, x2_big, params, sim)
        assert jnp.allclose(out, ref, atol=1e-3, rtol=1e-3), (
            sim, float(jnp.max(jnp.abs(out - ref))))

    # bf16-stored docs: streamed directly in bf16 (half the HBM traffic, no
    # wrapper re-cast pass); matmuls run bf16 on the MXU with f32 accumulate.
    x2_bf16 = x2_big.astype(jnp.bfloat16)
    for sim in ("ip", "l2"):
        out = jax.block_until_ready(
            contrastive_forward(x1, x2_bf16, params, similarity=sim))
        ref = reference(x1, x2_bf16, params, sim)
        assert jnp.allclose(out, ref, atol=1e-1, rtol=1e-1), (
            sim, float(jnp.max(jnp.abs(out - ref))))

    print("KERNEL_OK")
</pallas_src>

<mosaic_0001>
module attributes {stable_mosaic.version = 11 : i64} {
  func.func @_ip_kernel(%arg0: i32, %arg1: memref<64x768xf32, #tpu.memory_space<vmem>>, %arg2: memref<1x768xf32, #tpu.memory_space<vmem>>, %arg3: memref<1x1xf32, #tpu.memory_space<smem>>, %arg4: memref<1x64xf32, #tpu.memory_space<vmem>>) attributes {dimension_semantics = [#tpu.dimension_semantics<parallel>], iteration_bounds = array<i64: 1>, scalar_prefetch = 0 : i64, scratch_operands = 0 : i64, tpu.core_type = #tpu.core_type<tc>, window_params = [{transform_indices = @transform_0, window_bounds = array<i64: 64, 768>}, {pipeline_mode = #tpu.pipeline_mode<synchronous>, transform_indices = @transform_1, window_bounds = array<i64: 1, 768>}, {transform_indices = @transform_2, window_bounds = array<i64: 1, 1>}, {transform_indices = @transform_3, window_bounds = array<i64: 1, 64>}]} {
    %c0 = arith.constant 0 : index
    %c0_0 = arith.constant 0 : index
    %0 = vector.load %arg2[%c0, %c0_0] : memref<1x768xf32, #tpu.memory_space<vmem>>, vector<1x768xf32>
    %c0_1 = arith.constant 0 : index
    %c0_2 = arith.constant 0 : index
    %1 = vector.load %arg1[%c0_1, %c0_2] : memref<64x768xf32, #tpu.memory_space<vmem>>, vector<64x768xf32>
    %cst = arith.constant dense<0.000000e+00> : vector<1x64xf32>
    %2 = tpu.matmul %0, %1, %cst {dimension_numbers = #tpu.dot_dimension_numbers<[1], [1], [0], [0], [0, 0, 1, 0], [], []>} : vector<1x768xf32>, vector<64x768xf32>, vector<1x64xf32> -> vector<1x64xf32>
    %c0_3 = arith.constant 0 : index
    %c0_4 = arith.constant 0 : index
    %3 = memref.load %arg3[%c0_3, %c0_4] : memref<1x1xf32, #tpu.memory_space<smem>>
    %4 = vector.broadcast %3 : f32 to vector<1x64xf32>
    %5 = arith.addf %2, %4 : vector<1x64xf32>
    %c0_5 = arith.constant 0 : index
    %c0_6 = arith.constant 0 : index
    %6 = vector.load %arg4[%c0_5, %c0_6] : memref<1x64xf32, #tpu.memory_space<vmem>>, vector<1x64xf32>
    tpu.vector_store %arg4[%c0_5, %c0_6], %5 {strides = array<i32>} : memref<1x64xf32, #tpu.memory_space<vmem>>, vector<1x64xf32>,
    return
  }
  func.func @transform_0(%arg0: i32) -> (i32, i32) {
    %c0_i32 = arith.constant 0 : i32
    %c0_i32_0 = arith.constant 0 : i32
    return %arg0, %c0_i32 : i32, i32
  }
  func.func @transform_1(%arg0: i32) -> (i32, i32) {
    %c0_i32 = arith.constant 0 : i32
    %c0_i32_0 = arith.constant 0 : i32
    %c0_i32_1 = arith.constant 0 : i32
    return %c0_i32, %c0_i32_0 : i32, i32
  }
  func.func @transform_2(%arg0: i32) -> (i32, i32) {
    %c0_i32 = arith.constant 0 : i32
    %c0_i32_0 = arith.constant 0 : i32
    %c0_i32_1 = arith.constant 0 : i32
    return %c0_i32, %c0_i32_0 : i32, i32
  }
  func.func @transform_3(%arg0: i32) -> (i32, i32) {
    %c0_i32 = arith.constant 0 : i32
    %c0_i32_0 = arith.constant 0 : i32
    return %c0_i32, %arg0 : i32, i32
  }
}

</mosaic_0001>

<llo_original>
// kernel: tpu_custom_call.1
$region0: #{tpu_custom_call.1}
  #allocation0 [shape = 'u32[]', space=smem, size = 0x4, offset = 0x4, fixed_abs, tag = 'smem constant byte address 0x4 - core index']
  #allocation1 [shape = 'u32[144,128]{1,0:T(1,128)}', space=vmem, size = 0x12000, scoped, tag = 'internal scratch']
  #allocation2 [shape = 'f32[1,1]{1,0:T(1,128)S(6)}', space=smem, size = 0x200, scoped, tag = 'scoped memory for tpu_custom_call.1']
  %s0 = inlined_call_operand.hbm [shape: f32[64,768], index: 0, kind: input, shape index: {}]
  %s1 = inlined_call_operand.hbm [shape: f32[1,768], index: 1, kind: input, shape index: {}]
  %s2 = inlined_call_operand.<no memory space> [shape: f32[1,1], index: 2, kind: input, shape index: {}]
  %s3 = inlined_call_operand.hbm [shape: f32[1,64], index: 3, kind: output, shape index: {}]
  %s4 = sld [smem:[#allocation0]]
  $region30: #{tpu_custom_call.1} parent=0
    _
  %s6 = ssub.s32 1, %s4
  %s7 = scalar_select 0, %s6, %s4
  %8 = sst [smem:[#allocation2]] %s2
  $region1: #{tpu_custom_call.1} parent=0
    #allocation3 [shape = 'u8[196608]{0}', space=vmem, size = 0x30000, scoped, tag = 'input window, operand 0, single buffered']
    #allocation4 [shape = 's32[1]{0}', space=sflag, size = 0x4, scoped, tag = 'scoped memory for tpu_custom_call.1']
    #allocation5 [shape = 's32[1]{0}', space=sflag, size = 0x4, scoped, tag = 'scoped memory for tpu_custom_call.1']
    #allocation6 [shape = 'u8[3072]{0}', space=vmem, size = 0xc00, scoped, tag = 'input window, operand 1, single buffered']
    #allocation7 [shape = 's32[1]{0}', space=sflag, size = 0x4, scoped, tag = 'scoped memory for tpu_custom_call.1']
    #allocation8 [shape = 'u8[512]{0}', space=vmem, size = 0x400, scoped, tag = 'output window, operand 0, single buffered']
    %9 = vsyncpa [#allocation4], 0
    %10 = vsyncpa [#allocation7], 0
    %11 = vsyncpa [#allocation5], 0
    // Predicated region
    $region2: #{tpu_custom_call.1} parent=1 // pred_check
      _
    $region3: #{tpu_custom_call.1} parent=1 // pred_check_branch
      %13 = sbr.rel (0) target = $region5
    $region4: #{tpu_custom_call.1} parent=1 // pred_region
      %s15 = ssub.s32 6144, 6144
      %16 = vsyncadd [#allocation4], %s15
      %s17 = sshll.u32 [#allocation3], 4
      %s18 = int_to_ptr.vmem [resolvable:$true] %s17
      %23 = dma.hbm_to_vmem [thread:$0]  %s0, 6144, %s18, [#allocation4], 768, 768, 48
    $region5: #{tpu_custom_call.1} parent=1 // pred_fallthru
      _
    // Predicated region
    $region6: #{tpu_custom_call.1} parent=1 // pred_check
      _
    $region7: #{tpu_custom_call.1} parent=1 // pred_check_branch
      %25 = sbr.rel (0) target = $region9
    $region8: #{tpu_custom_call.1} parent=1 // pred_region
      %s27 = ssub.s32 96, 96
      %28 = vsyncadd [#allocation7], %s27
      %s30 = sshll.u32 [#allocation6], 4
      %s31 = int_to_ptr.vmem [resolvable:$true] %s30
      %33 = dma.hbm_to_vmem [thread:$0]  %s1, 96, %s31, [#allocation7]
    $region9: #{tpu_custom_call.1} parent=1 // pred_fallthru
      _
    // Predicated region
    $region10: #{tpu_custom_call.1} parent=1 // pred_check
      _
    $region11: #{tpu_custom_call.1} parent=1 // pred_check_branch
      %35 = sbr.rel (0) target = $region13
    $region12: #{tpu_custom_call.1} parent=1 // pred_region
      _
    $region13: #{tpu_custom_call.1} parent=1 // pred_fallthru
      _
    // Predicated region
    $region14: #{tpu_custom_call.1} parent=1 // pred_check
      _
    $region15: #{tpu_custom_call.1} parent=1 // pred_check_branch
      %37 = sbr.rel (0) target = $region17
    $region16: #{tpu_custom_call.1} parent=1 // pred_region
      %38 = dma.done [#allocation4], 6144
    $region17: #{tpu_custom_call.1} parent=1 // pred_fallthru
      _
    // Predicated region
    $region18: #{tpu_custom_call.1} parent=1 // pred_check
      _
    $region19: #{tpu_custom_call.1} parent=1 // pred_check_branch
      %40 = sbr.rel (0) target = $region21
    $region20: #{tpu_custom_call.1} parent=1 // pred_region
      %41 = dma.done [#allocation7], 96
    $region21: #{tpu_custom_call.1} parent=1 // pred_fallthru
      _
    %v42 = vld [vmem:[#allocation6] sm:$0x3f]
    %v43 = vld [vmem:[#allocation3] sm:$0xff]
    %v44 = vld [vmem:[#allocation3 + $0x8] sm:$0xff]
    %v45 = vld [vmem:[#allocation3 + $0x10] sm:$0xff]
    %v46 = vld [vmem:[#allocation3 + $0x18] sm:$0xff]
    %v47 = vld [vmem:[#allocation3 + $0x20] sm:$0xff]
    %v48 = vld [vmem:[#allocation3 + $0x28] sm:$0xff]
    %v49 = vld [vmem:[#allocation3 + $0x30] sm:$0xff]
    %v50 = vld [vmem:[#allocation3 + $0x38] sm:$0xff]
    %v51 = vld [vmem:[#allocation3 + $0x40] sm:$0xff]
    %v52 = vld [vmem:[#allocation3 + $0x48] sm:$0xff]
    %v53 = vld [vmem:[#allocation3 + $0x50] sm:$0xff]
    %v54 = vld [vmem:[#allocation3 + $0x58] sm:$0xff]
    %v55 = vld [vmem:[#allocation3 + $0x60] sm:$0xff]
    %v56 = vld [vmem:[#allocation3 + $0x68] sm:$0xff]
    %v57 = vld [vmem:[#allocation3 + $0x70] sm:$0xff]
    %v58 = vld [vmem:[#allocation3 + $0x78] sm:$0xff]
    %v59 = vld [vmem:[#allocation3 + $0x80] sm:$0xff]
    %v60 = vld [vmem:[#allocation3 + $0x88] sm:$0xff]
    %v61 = vld [vmem:[#allocation3 + $0x90] sm:$0xff]
    %v62 = vld [vmem:[#allocation3 + $0x98] sm:$0xff]
    %v63 = vld [vmem:[#allocation3 + $0xa0] sm:$0xff]
    %v64 = vld [vmem:[#allocation3 + $0xa8] sm:$0xff]
    %v65 = vld [vmem:[#allocation3 + $0xb0] sm:$0xff]
    %v66 = vld [vmem:[#allocation3 + $0xb8] sm:$0xff]
    %v67 = vld [vmem:[#allocation3 + $0xc0] sm:$0xff]
    %v68 = vld [vmem:[#allocation3 + $0xc8] sm:$0xff]
    %v69 = vld [vmem:[#allocation3 + $0xd0] sm:$0xff]
    %v70 = vld [vmem:[#allocation3 + $0xd8] sm:$0xff]
    %v71 = vld [vmem:[#allocation3 + $0xe0] sm:$0xff]
    %v72 = vld [vmem:[#allocation3 + $0xe8] sm:$0xff]
    %v73 = vld [vmem:[#allocation3 + $0xf0] sm:$0xff]
    %v74 = vld [vmem:[#allocation3 + $0xf8] sm:$0xff]
    %v75 = vld [vmem:[#allocation3 + $0x100] sm:$0xff]
    %v76 = vld [vmem:[#allocation3 + $0x108] sm:$0xff]
    %v77 = vld [vmem:[#allocation3 + $0x110] sm:$0xff]
    %v78 = vld [vmem:[#allocation3 + $0x118] sm:$0xff]
    %v79 = vld [vmem:[#allocation3 + $0x120] sm:$0xff]
    %v80 = vld [vmem:[#allocation3 + $0x128] sm:$0xff]
    %v81 = vld [vmem:[#allocation3 + $0x130] sm:$0xff]
    %v82 = vld [vmem:[#allocation3 + $0x138] sm:$0xff]
    %v83 = vld [vmem:[#allocation3 + $0x140] sm:$0xff]
    %v84 = vld [vmem:[#allocation3 + $0x148] sm:$0xff]
    %v85 = vld [vmem:[#allocation3 + $0x150] sm:$0xff]
    %v86 = vld [vmem:[#allocation3 + $0x158] sm:$0xff]
    %v87 = vld [vmem:[#allocation3 + $0x160] sm:$0xff]
    %v88 = vld [vmem:[#allocation3 + $0x168] sm:$0xff]
    %v89 = vld [vmem:[#allocation3 + $0x170] sm:$0xff]
    %v90 = vld [vmem:[#allocation3 + $0x178] sm:$0xff]
    %s91 = sld [smem:[#allocation2]]
    %v92 = vstv %s91
    %v94 = vlaneseq
    %v95 = vshrl.u32 %v94, 7
    %v96 = vsub.s32 0, %v95
    %v97 = vrot.slane %v42, %v96
    %v98 = vlaneseq
    %v99 = vshrl.u32 %v98, 7
    %v100 = vsub.s32 1, %v99
    %v101 = vrot.slane %v42, %v100
    %v102 = vlaneseq
    %v103 = vshrl.u32 %v102, 7
    %v104 = vsub.s32 2, %v103
    %v105 = vrot.slane %v42, %v104
    %v106 = vlaneseq
    %v107 = vshrl.u32 %v106, 7
    %v108 = vsub.s32 3, %v107
    %v109 = vrot.slane %v42, %v108
    %v110 = vlaneseq
    %v111 = vshrl.u32 %v110, 7
    %v112 = vsub.s32 4, %v111
    %v113 = vrot.slane %v42, %v112
    %v114 = vlaneseq
    %v115 = vshrl.u32 %v114, 7
    %v116 = vsub.s32 5, %v115
    %v117 = vrot.slane %v42, %v116
    %124 = vmatprep.subr.mxu0 0.0
    %125 = vmatpush1.xpose.msra.mxu0 0.0
    %126 = vmatprep.subr.mxu0 0.0
    %127 = vmatpush1.xpose.msra.mxu0 0.0
    %128 = vmatprep.subr.mxu0 0.0
    %129 = vmatpush1.xpose.msra.mxu0 0.0
    %130 = vmatprep.subr.mxu0 0.0
    %131 = vmatpush1.xpose.msra.mxu0 0.0
    %132 = vmatprep.subr.mxu0 0.0
    %133 = vmatpush1.xpose.msra.mxu0 0.0
    %134 = vmatprep.subr.mxu0 0.0
    %135 = vmatpush1.xpose.msra.mxu0 0.0
    %136 = vmatprep.subr.mxu0 0.0
    %137 = vmatpush1.xpose.msra.mxu0 0.0
    %138 = vmatprep.subr.mxu0 0.0
    %139 = vmatpush1.xpose.msra.mxu0 0.0
    %140 = vmatprep.subr.mxu0 %v86
    %141 = vmatpush1.xpose.msra.mxu0 %v85
    %142 = vmatprep.subr.mxu0 %v80
    %143 = vmatpush1.xpose.msra.mxu0 %v79
    %144 = vmatprep.subr.mxu0 %v74
    %145 = vmatpush1.xpose.msra.mxu0 %v73
    %146 = vmatprep.subr.mxu0 %v68
    %147 = vmatpush1.xpose.msra.mxu0 %v67
    %148 = vmatprep.subr.mxu0 %v62
    %149 = vmatpush1.xpose.msra.mxu0 %v61
    %150 = vmatprep.subr.mxu0 %v56
    %151 = vmatpush1.xpose.msra.mxu0 %v55
    %152 = vmatprep.subr.mxu0 %v50
    %153 = vmatpush1.xpose.msra.mxu0 %v49
    %154 = vmatprep.subr.mxu0 %v44
    %155 = vmatpush1.xpose.msra.mxu0 %v43
    %156 = vmatprep.subr.mxu0 0.0
    %157 = vmatpush2.xpose.msra.mxu0 0.0
    %158 = vmatprep.subr.mxu0 0.0
    %159 = vmatpush2.xpose.msra.mxu0 0.0
    %160 = vmatprep.subr.mxu0 0.0
    %161 = vmatpush2.xpose.msra.mxu0 0.0
    %162 = vmatprep.subr.mxu0 0.0
    %163 = vmatpush2.xpose.msra.mxu0 0.0
    %164 = vmatprep.subr.mxu0 0.0
    %165 = vmatpush2.xpose.msra.mxu0 0.0
    %166 = vmatprep.subr.mxu0 0.0
    %167 = vmatpush2.xpose.msra.mxu0 0.0
    %168 = vmatprep.subr.mxu0 0.0
    %169 = vmatpush2.xpose.msra.mxu0 0.0
    %170 = vmatprep.subr.mxu0 0.0
    %171 = vmatpush2.xpose.msra.mxu0 0.0
    %172 = vmatprep.subr.mxu0 0.0
    %173 = vmatpush2.xpose.msra.mxu0 0.0
    %174 = vmatprep.subr.mxu0 0.0
    %175 = vmatpush2.xpose.msra.mxu0 0.0
    %176 = vmatprep.subr.mxu0 0.0
    %177 = vmatpush2.xpose.msra.mxu0 0.0
    %178 = vmatprep.subr.mxu0 0.0
    %179 = vmatpush2.xpose.msra.mxu0 0.0
    %180 = vmatprep.subr.mxu0 0.0
    %181 = vmatpush2.xpose.msra.mxu0 0.0
    %182 = vmatprep.subr.mxu0 0.0
    %183 = vmatpush2.xpose.msra.mxu0 0.0
    %184 = vmatprep.subr.mxu0 0.0
    %185 = vmatpush2.xpose.msra.mxu0 0.0
    %186 = vmatprep.subr.mxu0 0.0
    %187 = vmatpush2.xpose.msra.mxu0 0.0
    %188 = vmatprep.mubr.f32.mxu0 %v101
    %189 = vmatmul.mubr.f32.gmra.mxu0 %v97
    %v190 = vpop.f32.mrf.mxu0
    %v191 = vadd.f32 %v92, %v190
    %v192 = vpop.f32.mrf.mxu0
    %193 = vdwg.mxu0
    %194 = vmatprep.subr.mxu0 0.0
    %195 = vmatpush1.xpose.msra.mxu0 0.0
    %196 = vmatprep.subr.mxu0 0.0
    %197 = vmatpush1.xpose.msra.mxu0 0.0
    %198 = vmatprep.subr.mxu0 0.0
    %199 = vmatpush1.xpose.msra.mxu0 0.0
    %200 = vmatprep.subr.mxu0 0.0
    %201 = vmatpush1.xpose.msra.mxu0 0.0
    %202 = vmatprep.subr.mxu0 0.0
    %203 = vmatpush1.xpose.msra.mxu0 0.0
    %204 = vmatprep.subr.mxu0 0.0
    %205 = vmatpush1.xpose.msra.mxu0 0.0
    %206 = vmatprep.subr.mxu0 0.0
    %207 = vmatpush1.xpose.msra.mxu0 0.0
    %208 = vmatprep.subr.mxu0 0.0
    %209 = vmatpush1.xpose.msra.mxu0 0.0
    %210 = vmatprep.subr.mxu0 %v88
    %211 = vmatpush1.xpose.msra.mxu0 %v87
    %212 = vmatprep.subr.mxu0 %v82
    %213 = vmatpush1.xpose.msra.mxu0 %v81
    %214 = vmatprep.subr.mxu0 %v76
    %215 = vmatpush1.xpose.msra.mxu0 %v75
    %216 = vmatprep.subr.mxu0 %v70
    %217 = vmatpush1.xpose.msra.mxu0 %v69
    %218 = vmatprep.subr.mxu0 %v64
    %219 = vmatpush1.xpose.msra.mxu0 %v63
    %220 = vmatprep.subr.mxu0 %v58
    %221 = vmatpush1.xpose.msra.mxu0 %v57
    %222 = vmatprep.subr.mxu0 %v52
    %223 = vmatpush1.xpose.msra.mxu0 %v51
    %224 = vmatprep.subr.mxu0 %v46
    %225 = vmatpush1.xpose.msra.mxu0 %v45
    %226 = vmatprep.subr.mxu0 0.0
    %227 = vmatpush2.xpose.msra.mxu0 0.0
    %228 = vmatprep.subr.mxu0 0.0
    %229 = vmatpush2.xpose.msra.mxu0 0.0
    %230 = vmatprep.subr.mxu0 0.0
    %231 = vmatpush2.xpose.msra.mxu0 0.0
    %232 = vmatprep.subr.mxu0 0.0
    %233 = vmatpush2.xpose.msra.mxu0 0.0
    %234 = vmatprep.subr.mxu0 0.0
    %235 = vmatpush2.xpose.msra.mxu0 0.0
    %236 = vmatprep.subr.mxu0 0.0
    %237 = vmatpush2.xpose.msra.mxu0 0.0
    %238 = vmatprep.subr.mxu0 0.0
    %239 = vmatpush2.xpose.msra.mxu0 0.0
    %240 = vmatprep.subr.mxu0 0.0
    %241 = vmatpush2.xpose.msra.mxu0 0.0
    %242 = vmatprep.subr.mxu0 0.0
    %243 = vmatpush2.xpose.msra.mxu0 0.0
    %244 = vmatprep.subr.mxu0 0.0
    %245 = vmatpush2.xpose.msra.mxu0 0.0
    %246 = vmatprep.subr.mxu0 0.0
    %247 = vmatpush2.xpose.msra.mxu0 0.0
    %248 = vmatprep.subr.mxu0 0.0
    %249 = vmatpush2.xpose.msra.mxu0 0.0
    %250 = vmatprep.subr.mxu0 0.0
    %251 = vmatpush2.xpose.msra.mxu0 0.0
    %252 = vmatprep.subr.mxu0 0.0
    %253 = vmatpush2.xpose.msra.mxu0 0.0
    %254 = vmatprep.subr.mxu0 0.0
    %255 = vmatpush2.xpose.msra.mxu0 0.0
    %256 = vmatprep.subr.mxu0 0.0
    %257 = vmatpush2.xpose.msra.mxu0 0.0
    %258 = vmatprep.mubr.f32.mxu0 %v109
    %259 = vmatmul.mubr.f32.gmra.mxu0 %v105
    %v260 = vpop.f32.mrf.mxu0
    %v261 = vadd.f32 %v191, %v260
    %v262 = vpop.f32.mrf.mxu0
    %263 = vdwg.mxu0
    %264 = vmatprep.subr.mxu0 0.0
    %265 = vmatpush1.xpose.msra.mxu0 0.0
    %266 = vmatprep.subr.mxu0 0.0
    %267 = vmatpush1.xpose.msra.mxu0 0.0
    %268 = vmatprep.subr.mxu0 0.0
    %269 = vmatpush1.xpose.msra.mxu0 0.0
    %270 = vmatprep.subr.mxu0 0.0
    %271 = vmatpush1.xpose.msra.mxu0 0.0
    %272 = vmatprep.subr.mxu0 0.0
    %273 = vmatpush1.xpose.msra.mxu0 0.0
    %274 = vmatprep.subr.mxu0 0.0
    %275 = vmatpush1.xpose.msra.mxu0 0.0
    %276 = vmatprep.subr.mxu0 0.0
    %277 = vmatpush1.xpose.msra.mxu0 0.0
    %278 = vmatprep.subr.mxu0 0.0
    %279 = vmatpush1.xpose.msra.mxu0 0.0
    %280 = vmatprep.subr.mxu0 %v90
    %281 = vmatpush1.xpose.msra.mxu0 %v89
    %282 = vmatprep.subr.mxu0 %v84
    %283 = vmatpush1.xpose.msra.mxu0 %v83
    %284 = vmatprep.subr.mxu0 %v78
    %285 = vmatpush1.xpose.msra.mxu0 %v77
    %286 = vmatprep.subr.mxu0 %v72
    %287 = vmatpush1.xpose.msra.mxu0 %v71
    %288 = vmatprep.subr.mxu0 %v66
    %289 = vmatpush1.xpose.msra.mxu0 %v65
    %290 = vmatprep.subr.mxu0 %v60
    %291 = vmatpush1.xpose.msra.mxu0 %v59
    %292 = vmatprep.subr.mxu0 %v54
    %293 = vmatpush1.xpose.msra.mxu0 %v53
    %294 = vmatprep.subr.mxu0 %v48
    %295 = vmatpush1.xpose.msra.mxu0 %v47
    %296 = vmatprep.subr.mxu0 0.0
    %297 = vmatpush2.xpose.msra.mxu0 0.0
    %298 = vmatprep.subr.mxu0 0.0
    %299 = vmatpush2.xpose.msra.mxu0 0.0
    %300 = vmatprep.subr.mxu0 0.0
    %301 = vmatpush2.xpose.msra.mxu0 0.0
    %302 = vmatprep.subr.mxu0 0.0
    %303 = vmatpush2.xpose.msra.mxu0 0.0
    %304 = vmatprep.subr.mxu0 0.0
    %305 = vmatpush2.xpose.msra.mxu0 0.0
    %306 = vmatprep.subr.mxu0 0.0
    %307 = vmatpush2.xpose.msra.mxu0 0.0
    %308 = vmatprep.subr.mxu0 0.0
    %309 = vmatpush2.xpose.msra.mxu0 0.0
    %310 = vmatprep.subr.mxu0 0.0
    %311 = vmatpush2.xpose.msra.mxu0 0.0
    %312 = vmatprep.subr.mxu0 0.0
    %313 = vmatpush2.xpose.msra.mxu0 0.0
    %314 = vmatprep.subr.mxu0 0.0
    %315 = vmatpush2.xpose.msra.mxu0 0.0
    %316 = vmatprep.subr.mxu0 0.0
    %317 = vmatpush2.xpose.msra.mxu0 0.0
    %318 = vmatprep.subr.mxu0 0.0
    %319 = vmatpush2.xpose.msra.mxu0 0.0
    %320 = vmatprep.subr.mxu0 0.0
    %321 = vmatpush2.xpose.msra.mxu0 0.0
    %322 = vmatprep.subr.mxu0 0.0
    %323 = vmatpush2.xpose.msra.mxu0 0.0
    %324 = vmatprep.subr.mxu0 0.0
    %325 = vmatpush2.xpose.msra.mxu0 0.0
    %326 = vmatprep.subr.mxu0 0.0
    %327 = vmatpush2.xpose.msra.mxu0 0.0
    %328 = vmatprep.mubr.f32.mxu0 %v117
    %329 = vmatmul.mubr.f32.gmra.mxu0 %v113
    %v330 = vpop.f32.mrf.mxu0
    %v331 = vadd.f32 %v261, %v330
    %v332 = vpop.f32.mrf.mxu0
    %333 = vdwg.mxu0
    %vm334 = vcmask 516096
    %335 = vst.msk [vmem:[#allocation8] sm:$0x1] %vm334, %v331
    // Predicated region
    $region22: #{tpu_custom_call.1} parent=1 // pred_check
      _
    $region23: #{tpu_custom_call.1} parent=1 // pred_check_branch
      %337 = sbr.rel (0) target = $region25
    $region24: #{tpu_custom_call.1} parent=1 // pred_region
      %s339 = ssub.s32 16, 16
      %340 = vsyncadd [#allocation5], %s339
      %s342 = sshll.u32 [#allocation8], 4
      %s343 = int_to_ptr.vmem [resolvable:$true] %s342
      %345 = dma.vmem_to_hbm [thread:$0]  %s343, 16, %s3, [#allocation5]
    $region25: #{tpu_custom_call.1} parent=1 // pred_fallthru
      _
    // Predicated region
    $region26: #{tpu_custom_call.1} parent=1 // pred_check
      _
    $region27: #{tpu_custom_call.1} parent=1 // pred_check_branch
      %347 = sbr.rel (0) target = $region29
    $region28: #{tpu_custom_call.1} parent=1 // pred_region
      %348 = dma.done [#allocation5], 16
    $region29: #{tpu_custom_call.1} parent=1 // pred_fallthru
      _
    %349 = vsyncpa [#allocation4], 1
    %350 = vsyncpa [#allocation7], 1
    %351 = vsyncpa [#allocation5], 1

</llo_original>
